<compile_context>
chip_gen: v5e
topology: v5e:2x2
jax: 0.10.0
libtpu: 0.0.40
codegen_flags: <defaults>
</compile_context>

<pallas_src>
from functools import partial

import numpy as np
import jax
import jax.numpy as jnp
from jax.experimental import pallas as pl
from jax.experimental.pallas import tpu as pltpu

CL_TEMP = 0.1
CL_ANCHOR_LEVEL = "eop_matrix"


# ---------------------------------------------------------------------------
# Kernel 1: fused amax scatter-pool + anchor gather
#   out[b, slot, h] = max_{i : tok_dest[b, i] == slot} src[b, i, h]   (0 if none)
#   tok_dest[b, i] = anchor slot of (b, extract_eop_segment_ids[b, i]) or -1
# ---------------------------------------------------------------------------
def _amax_anchor_pool_kernel(dest_ref, src_ref, out_ref):
    # dest_ref : SMEM (B*S,) int32 (scalar prefetch, flat -> no 2-D SMEM padding)
    # src_ref  : VMEM (S, tH)      (batch dim squeezed by BlockSpec)
    # out_ref  : VMEM (n_slots, tH)
    b = pl.program_id(0)
    S = src_ref.shape[0]
    tH = src_ref.shape[1]
    n_slots = out_ref.shape[0]
    base = b * S
    neg_inf = jnp.float32(-jnp.inf)

    # This grid step owns its whole output block: init sentinel in place
    # (no f32 scratch; max accumulation is exact in the source dtype).
    out_ref[...] = jnp.full(out_ref.shape, neg_inf, dtype=out_ref.dtype)

    def flush(dest, run_max):
        # One RMW max write per contiguous run; non-anchor runs (dest == -1)
        # never touch VMEM.
        @pl.when(dest >= 0)
        def _():
            j = jnp.clip(dest, 0, n_slots - 1)  # cheap guard: no HW bounds check
            cur = out_ref[pl.ds(j, 1), :].astype(jnp.float32)
            out_ref[pl.ds(j, 1), :] = jnp.maximum(cur, run_max).astype(out_ref.dtype)

    def body(i, carry):
        cur_dest, run_max = carry
        d = dest_ref[base + i]
        row = src_ref[pl.ds(i, 1), :].astype(jnp.float32)   # keep max in f32 regs
        boundary = d != cur_dest

        @pl.when(boundary)
        def _():
            flush(cur_dest, run_max)

        # Arithmetic blend (scalar-only where): reset the running max at run
        # boundaries by adding -inf; assumes finite inputs.
        reset = jnp.where(boundary, neg_inf, jnp.float32(0.0))
        new_max = jnp.maximum(row, run_max + reset)
        return d, new_max

    init = (dest_ref[base], jnp.full((1, tH), neg_inf, dtype=jnp.float32))
    last_dest, last_max = jax.lax.fori_loop(0, S, body, init)
    flush(last_dest, last_max)

    # Untouched anchor slots -> 0, matching scatter_reduce(include_self=False)
    # over a zeros_like destination (finite inputs assumed).
    o = out_ref[...].astype(jnp.float32)
    out_ref[...] = jnp.where(o == neg_inf, jnp.float32(0.0), o).astype(out_ref.dtype)
    # TODO(synk): vectorize further by max-reducing full (8, tH) sublane chunks
    # when all 8 tokens share a destination (run-interior fast path).


def _pick_h_tile(S, H, itemsize, *, cap=1024, budget_bytes=24 << 20):
    """Largest multiple of 128 dividing H, <= cap, whose double-buffered
    (S, tH) src block fits the VMEM budget; else full H."""
    if H % 128 != 0:
        return H
    t = min(H, (cap // 128) * 128)
    while t > 128 and (H % t != 0 or 2 * S * t * itemsize > budget_bytes):
        t -= 128
    return t


def amax_anchor_pool(src, tok_dest_flat, n_slots, *, h_tile_cap=1024):
    """Returns (B, n_slots, H) compact pooled anchor features."""
    B, S, H = src.shape
    elt = jnp.dtype(src.dtype).itemsize
    tH = _pick_h_tile(S, H, elt, cap=h_tile_cap)
    grid = (B, H // tH)

    # Explicit VMEM budget from actual block sizes (double-buffered in + out),
    # capped at v7x's 64 MiB physical VMEM.
    need = 2 * (S * tH * elt) + 2 * (n_slots * tH * elt) + (4 << 20)
    vmem_limit = int(min(max(need, 16 << 20), 64 << 20))

    grid_spec = pltpu.PrefetchScalarGridSpec(
        num_scalar_prefetch=1,
        grid=grid,
        in_specs=[pl.BlockSpec((None, S, tH), lambda b, h, dest: (b, 0, h))],
        out_specs=pl.BlockSpec((None, n_slots, tH), lambda b, h, dest: (b, 0, h)),
    )
    return pl.pallas_call(
        _amax_anchor_pool_kernel,
        out_shape=jax.ShapeDtypeStruct((B, n_slots, H), src.dtype),
        grid_spec=grid_spec,
        compiler_params=pltpu.CompilerParams(
            dimension_semantics=("parallel", "parallel"),
            vmem_limit_bytes=vmem_limit),
    )(jnp.asarray(tok_dest_flat, dtype=jnp.int32), src)


# ---------------------------------------------------------------------------
# Kernel 2: eop_level_matrix_cl_loss hot path
#   cosine-sim / temp -> exp -> masked numerator/denominator sums
#   -> mean(-log(p)) over nonzero p
# ---------------------------------------------------------------------------
def _eop_matrix_cl_loss_kernel(feat_ref, seg_row_ref, seg_col_ref, out_ref, *,
                               inv_temp):
    x = feat_ref[...].astype(jnp.float32)                         # (N, H)
    sumsq = jnp.sum(x * x, axis=-1, keepdims=True)
    inv_norm = jax.lax.rsqrt(jnp.maximum(sumsq, jnp.float32(1e-16)))
    xn = x * inv_norm                                             # (N, H)

    # bf16 MXU operands, f32 accumulation; 1/temp folded into the lhs.
    a = (xn * jnp.float32(inv_temp)).astype(jnp.bfloat16)
    bm = xn.astype(jnp.bfloat16)
    sim = jnp.einsum("nh,mh->nm", a, bm,
                     preferred_element_type=jnp.float32)          # (N, N)

    # Row-wise stabilization + lane-dense (last-axis) reductions.  sim and
    # both masks are symmetric, so this equals the reference's axis-0 sums;
    # the max subtraction cancels in the numer/denom ratio.
    sim = sim - jnp.max(sim, axis=-1, keepdims=True)
    e = jnp.exp(sim)

    N = sim.shape[0]
    seg_row = seg_row_ref[...]                                    # (N, 1) i32
    seg_col = seg_col_ref[...]                                    # (1, N) i32
    same = seg_row == seg_col                                     # (N, N)
    # Exact diagonal exclusion.  NOTE: diag(sim) != 1/temp exactly once the
    # operands are bf16, so the "subtract exp(inv_temp - max)" shortcut is not
    # numerically safe; the iota mask is exact and cheap for N up to ~1k.
    ri = jax.lax.broadcasted_iota(jnp.int32, (N, N), 0)
    ci = jax.lax.broadcasted_iota(jnp.int32, (N, N), 1)
    not_diag = ri != ci

    numer = jnp.sum(jnp.where(same & not_diag, e, 0.0),
                    axis=-1, keepdims=True)                       # (N, 1)
    denom = numer + jnp.sum(jnp.where(same, 0.0, e),
                            axis=-1, keepdims=True)               # (N, 1)
    cl_prob = numer / denom

    valid = cl_prob > 0.0
    terms = jnp.where(valid, -jnp.log(jnp.where(valid, cl_prob, 1.0)), 0.0)
    total = jnp.sum(terms, axis=0, keepdims=True)                 # (1, 1)
    cnt = jnp.sum(valid.astype(jnp.float32), axis=0, keepdims=True)
    out_ref[...] = jnp.where(cnt > 0.0, total / cnt, 0.0)


def eop_matrix_cl_loss(anchor_feats, cl_segment_ids, temp):
    N, H = anchor_feats.shape
    seg = jnp.asarray(cl_segment_ids, dtype=jnp.int32)
    # Keep host-built (N,1)/(1,N) seg inputs: the lane-sparse column is a
    # negligible DMA and avoids an in-kernel (1,N)->(N,1) relayout.
    out = pl.pallas_call(
        partial(_eop_matrix_cl_loss_kernel, inv_temp=float(1.0 / temp)),
        out_shape=jax.ShapeDtypeStruct((1, 1), jnp.float32),
        in_specs=[
            pl.BlockSpec((N, H), lambda: (0, 0)),
            pl.BlockSpec((N, 1), lambda: (0, 0)),
            pl.BlockSpec((1, N), lambda: (0, 0)),
        ],
        out_specs=pl.BlockSpec((1, 1), lambda: (0, 0)),
    )(anchor_feats, seg.reshape(N, 1), seg.reshape(1, N))
    return out[0, 0]


# ---------------------------------------------------------------------------
# Host-side forward, mirroring CSSL.forward
# ---------------------------------------------------------------------------
def _build_cl_segment_ids(labels_np):
    cl_segment_ids = []
    seg_id = 0
    for ex_labels in labels_np:
        ex_eop = ex_labels[ex_labels != -100]
        if len(ex_eop) == 0:
            continue
        for l in ex_eop:
            cl_segment_ids.append(seg_id)
            if l == 0:
                seg_id += 1
        if ex_eop[-1] == 1:
            seg_id += 1
    return cl_segment_ids


def extract_anchor_features(sequence_output, extract_eop_segment_ids,
                            eop_index_for_aggregate):
    """Fused pool+gather: returns the (N, H) anchor EOP features (or None)."""
    B, S, H = sequence_output.shape
    seg_np = np.asarray(extract_eop_segment_ids).astype(np.int32)
    eop_idx_np = np.asarray(eop_index_for_aggregate)

    # Anchor (batch, position) pairs in the reference's gather order.
    anchors = [(b, int(eop_idx_np[b, s]))
               for b in range(B) for s in range(S) if eop_idx_np[b, s] != 0]
    if not anchors:
        return None

    # Per-batch compact slot assignment (duplicates share a slot).
    slot_of, per_batch = {}, [0] * B
    for b, pos in anchors:
        if (b, pos) not in slot_of:
            slot_of[(b, pos)] = per_batch[b]
            per_batch[b] += 1
    n_slots = max(8, ((max(per_batch) + 7) // 8) * 8)

    # Per-token destination slot (-1 for tokens not feeding any anchor).
    pos_to_slot = np.full((B, S), -1, dtype=np.int32)
    for (b, pos), slot in slot_of.items():
        if 0 <= pos < S:
            pos_to_slot[b, pos] = slot
    tok_dest = np.take_along_axis(pos_to_slot, np.clip(seg_np, 0, S - 1), axis=1)

    pooled = amax_anchor_pool(sequence_output, tok_dest.reshape(-1), n_slots)
    rows = np.array([b * n_slots + slot_of[(b, p)] for b, p in anchors],
                    dtype=np.int32)
    return pooled.reshape(B * n_slots, H)[jnp.asarray(rows)]


def cssl_forward(sequence_output, labels, extract_eop_segment_ids,
                 eop_index_for_aggregate, *, cl_temp=CL_TEMP,
                 cl_anchor_level=CL_ANCHOR_LEVEL):
    labels_np = np.asarray(labels)
    cl_segment_ids = _build_cl_segment_ids(labels_np)

    # When the loss condition fails the reference's pooled output is unused,
    # so skipping the pooling kernel here is semantically identical.
    if not (len(cl_segment_ids) > 2 and cl_segment_ids[-1] > 0):
        return jnp.float32(0.0)

    if cl_anchor_level != "eop_matrix":
        # TODO(synk): 'eop_list'/'eot_list' branches use random.choice
        # (nondeterministic host control flow); not implemented here.
        raise ValueError("unsupported cl_anchor_level %s" % cl_anchor_level)

    anchor_feats = extract_anchor_features(
        sequence_output, extract_eop_segment_ids, eop_index_for_aggregate)
    if anchor_feats is None:
        return jnp.float32(0.0)

    return eop_matrix_cl_loss(anchor_feats,
                              np.asarray(cl_segment_ids, np.int32), cl_temp)


# ---------------------------------------------------------------------------
# Pure-numpy references for verification
# ---------------------------------------------------------------------------
def _ref_pool_np(seq, seg_ids):
    pooled = np.zeros_like(seq)
    B, S, H = seq.shape
    for b in range(B):
        for j in range(S):
            srcs = seq[b][seg_ids[b] == j]
            if len(srcs):
                pooled[b, j] = srcs.max(axis=0)
    return pooled


def _ref_forward_np(seq, labels, seg_ids, eop_idx, temp, *, bf16_matmul):
    B, S, H = seq.shape
    pooled = _ref_pool_np(seq, seg_ids)
    tmp = (eop_idx + np.arange(B)[:, None] * S).reshape(-1)
    anchors = pooled.reshape(B * S, H)[tmp[eop_idx.reshape(-1) != 0]]
    seg = np.asarray(_build_cl_segment_ids(labels))

    xn = anchors / np.maximum(np.linalg.norm(anchors, axis=-1, keepdims=True), 1e-8)
    a, b = xn / temp, xn
    if bf16_matmul:
        a = np.asarray(jnp.asarray(a).astype(jnp.bfloat16).astype(jnp.float32))
        b = np.asarray(jnp.asarray(b).astype(jnp.bfloat16).astype(jnp.float32))
    sim = a @ b.T
    e = np.exp(sim)
    same = seg[None, :] == seg[:, None]
    num_mask = same & ~np.eye(len(seg), dtype=bool)
    den_mask = ~same
    numer = (num_mask * e).sum(0)
    denom = numer + (den_mask * e).sum(0)
    p = numer / denom
    return float((-np.log(p[p > 0])).mean())


if __name__ == "__main__":
    B, S, H = 2, 16, 32
    key = jax.random.PRNGKey(0)
    sequence_output = jax.random.normal(key, (B, S, H), dtype=jnp.float32)

    # Deterministic synthetic labels / segment ids (EOP positions marked).
    labels = np.full((B, S), -100, dtype=np.int32)
    labels[0, 3], labels[0, 7], labels[0, 11], labels[0, 15] = 1, 0, 1, 0
    labels[1, 4], labels[1, 9], labels[1, 14] = 1, 1, 0

    extract_eop_segment_ids = np.zeros((B, S), dtype=np.int32)
    extract_eop_segment_ids[0, 0:4] = 3
    extract_eop_segment_ids[0, 4:8] = 7
    extract_eop_segment_ids[0, 8:12] = 11
    extract_eop_segment_ids[0, 12:16] = 15
    extract_eop_segment_ids[1, 0:5] = 4
    extract_eop_segment_ids[1, 5:10] = 9
    extract_eop_segment_ids[1, 10:15] = 14
    extract_eop_segment_ids[1, 15] = 0   # padding token -> position 0

    eop_index_for_aggregate = np.zeros((B, S), dtype=np.int32)
    eop_index_for_aggregate[0, 0:4] = [3, 7, 11, 15]
    eop_index_for_aggregate[1, 0:3] = [4, 9, 14]

    # --- validate the fused pool+gather kernel (exact max, tight tolerance)
    anchor_feats = extract_anchor_features(
        sequence_output, extract_eop_segment_ids, eop_index_for_aggregate)
    anchor_feats = jax.block_until_ready(anchor_feats)

    pooled_ref = _ref_pool_np(np.asarray(sequence_output), extract_eop_segment_ids)
    anchors_ref = np.stack([pooled_ref[b, int(eop_index_for_aggregate[b, s])]
                            for b in range(B) for s in range(S)
                            if eop_index_for_aggregate[b, s] != 0])
    assert anchor_feats.shape == anchors_ref.shape, (anchor_feats.shape, anchors_ref.shape)
    assert np.allclose(np.asarray(anchor_feats), anchors_ref, rtol=1e-6, atol=1e-6)

    # --- full forward
    loss = cssl_forward(sequence_output, labels, extract_eop_segment_ids,
                        eop_index_for_aggregate)
    loss = float(jax.block_until_ready(loss))

    ref_bf16 = _ref_forward_np(np.asarray(sequence_output), labels,
                               extract_eop_segment_ids, eop_index_for_aggregate,
                               CL_TEMP, bf16_matmul=True)
    ref_f32 = _ref_forward_np(np.asarray(sequence_output), labels,
                              extract_eop_segment_ids, eop_index_for_aggregate,
                              CL_TEMP, bf16_matmul=False)

    assert np.isfinite(loss), "loss is not finite"
    # tight check vs a reference that mirrors the kernel's bf16 MXU inputs
    assert np.allclose(loss, ref_bf16, rtol=5e-3, atol=1e-4), (loss, ref_bf16)
    # looser semantic check vs the full-f32 reference (bf16 matmul relaxation)
    assert np.allclose(loss, ref_f32, rtol=5e-2, atol=1e-3), (loss, ref_f32)
    print("KERNEL_OK")
</pallas_src>

<mosaic_0001>
module attributes {stable_mosaic.version = 11 : i64} {
  func.func @_amax_anchor_pool_kernel(%arg0: i32, %arg1: i32, %arg2: memref<32xi32, #tpu.memory_space<smem>>, %arg3: memref<1x16x32xf32, #tpu.memory_space<vmem>>, %arg4: memref<1x8x32xf32, #tpu.memory_space<vmem>>) attributes {dimension_semantics = [#tpu.dimension_semantics<parallel>, #tpu.dimension_semantics<parallel>], iteration_bounds = array<i64: 2, 1>, scalar_prefetch = 1 : i64, scratch_operands = 0 : i64, tpu.core_type = #tpu.core_type<tc>, window_params = [{transform_indices = @transform_0, window_bounds = array<i64: 1, 16, 32>}, {transform_indices = @transform_1, window_bounds = array<i64: 1, 8, 32>}]} {
    %c16_i32 = arith.constant 16 : i32
    %0 = arith.muli %arg0, %c16_i32 : i32
    %cst = arith.constant 0xFF800000 : f32
    %1 = vector.broadcast %cst : f32 to vector<8x32xf32>
    %c0 = arith.constant 0 : index
    %c0_0 = arith.constant 0 : index
    %c0_1 = arith.constant 0 : index
    %2 = vector.load %arg4[%c0, %c0_0, %c0_1] : memref<1x8x32xf32, #tpu.memory_space<vmem>>, vector<1x8x32xf32>
    %3 = vector.shape_cast %2 : vector<1x8x32xf32> to vector<8x32xf32>
    %4 = vector.shape_cast %1 : vector<8x32xf32> to vector<1x8x32xf32>
    tpu.vector_store %arg4[%c0, %c0_0, %c0_1], %4 {strides = array<i32>} : memref<1x8x32xf32, #tpu.memory_space<vmem>>, vector<1x8x32xf32>,
    %5 = arith.index_cast %0 : i32 to index
    %6 = memref.load %arg2[%5] : memref<32xi32, #tpu.memory_space<smem>>
    %cst_2 = arith.constant 0xFF800000 : f32
    %7 = vector.broadcast %cst_2 : f32 to vector<1x32xf32>
    %cst_3 = arith.constant 0xFF800000 : f32
    %c0_i32 = arith.constant 0 : i32
    %c16_i32_4 = arith.constant 16 : i32
    %8 = arith.addi %c0_i32, %c16_i32_4 : i32
    %c1_i32 = arith.constant 1 : i32
    %9:2 = scf.for %arg5 = %c0_i32 to %8 step %c1_i32 iter_args(%arg6 = %6, %arg7 = %7) -> (i32, vector<1x32xf32>)  : i32 {
      %22 = arith.addi %0, %arg5 : i32
      %23 = arith.index_cast %22 : i32 to index
      %24 = memref.load %arg2[%23] : memref<32xi32, #tpu.memory_space<smem>>
      %c0_16 = arith.constant 0 : index
      %25 = arith.index_cast %arg5 : i32 to index
      %c0_17 = arith.constant 0 : index
      %26 = vector.load %arg3[%c0_16, %25, %c0_17] : memref<1x16x32xf32, #tpu.memory_space<vmem>>, vector<1x1x32xf32>
      %27 = vector.shape_cast %26 : vector<1x1x32xf32> to vector<1x32xf32>
      %28 = arith.cmpi ne, %24, %arg6 : i32
      %29 = arith.extui %28 : i1 to i32
      %c0_i32_18 = arith.constant 0 : i32
      %30 = arith.cmpi ne, %29, %c0_i32_18 : i32
      scf.if %30 {
        %c0_i32_20 = arith.constant 0 : i32
        %35 = arith.cmpi sge, %arg6, %c0_i32_20 : i32
        %36 = arith.extui %35 : i1 to i32
        %c0_i32_21 = arith.constant 0 : i32
        %37 = arith.cmpi ne, %36, %c0_i32_21 : i32
        scf.if %37 {
          %c0_i32_22 = arith.constant 0 : i32
          %c7_i32 = arith.constant 7 : i32
          %38 = arith.maxsi %c0_i32_22, %arg6 : i32
          %39 = arith.minsi %c7_i32, %38 : i32
          %c0_23 = arith.constant 0 : index
          %40 = arith.index_cast %39 : i32 to index
          %c0_24 = arith.constant 0 : index
          %41 = vector.load %arg4[%c0_23, %40, %c0_24] : memref<1x8x32xf32, #tpu.memory_space<vmem>>, vector<1x1x32xf32>
          %42 = vector.shape_cast %41 : vector<1x1x32xf32> to vector<1x32xf32>
          %43 = arith.maximumf %42, %arg7 : vector<1x32xf32>
          %c0_25 = arith.constant 0 : index
          %44 = arith.index_cast %39 : i32 to index
          %c0_26 = arith.constant 0 : index
          %45 = vector.load %arg4[%c0_25, %44, %c0_26] : memref<1x8x32xf32, #tpu.memory_space<vmem>>, vector<1x1x32xf32>
          %46 = vector.shape_cast %45 : vector<1x1x32xf32> to vector<1x32xf32>
          %47 = vector.shape_cast %43 : vector<1x32xf32> to vector<1x1x32xf32>
          tpu.vector_store %arg4[%c0_25, %44, %c0_26], %47 {strides = array<i32>} : memref<1x8x32xf32, #tpu.memory_space<vmem>>, vector<1x1x32xf32>,
        } else {
        }
      } else {
      }
      %cst_19 = arith.constant 0.000000e+00 : f32
      %31 = arith.select %28, %cst_3, %cst_19 : f32
      %32 = vector.broadcast %31 : f32 to vector<1x32xf32>
      %33 = arith.addf %arg7, %32 : vector<1x32xf32>
      %34 = arith.maximumf %27, %33 : vector<1x32xf32>
      scf.yield %24, %34 : i32, vector<1x32xf32>
    }
    %c16_i32_5 = arith.constant 16 : i32
    %c0_i32_6 = arith.constant 0 : i32
    %10 = arith.cmpi sge, %9#0, %c0_i32_6 : i32
    %11 = arith.extui %10 : i1 to i32
    %c0_i32_7 = arith.constant 0 : i32
    %12 = arith.cmpi ne, %11, %c0_i32_7 : i32
    scf.if %12 {
      %c0_i32_16 = arith.constant 0 : i32
      %c7_i32 = arith.constant 7 : i32
      %22 = arith.maxsi %c0_i32_16, %9#0 : i32
      %23 = arith.minsi %c7_i32, %22 : i32
      %c0_17 = arith.constant 0 : index
      %24 = arith.index_cast %23 : i32 to index
      %c0_18 = arith.constant 0 : index
      %25 = vector.load %arg4[%c0_17, %24, %c0_18] : memref<1x8x32xf32, #tpu.memory_space<vmem>>, vector<1x1x32xf32>
      %26 = vector.shape_cast %25 : vector<1x1x32xf32> to vector<1x32xf32>
      %27 = arith.maximumf %26, %9#1 : vector<1x32xf32>
      %c0_19 = arith.constant 0 : index
      %28 = arith.index_cast %23 : i32 to index
      %c0_20 = arith.constant 0 : index
      %29 = vector.load %arg4[%c0_19, %28, %c0_20] : memref<1x8x32xf32, #tpu.memory_space<vmem>>, vector<1x1x32xf32>
      %30 = vector.shape_cast %29 : vector<1x1x32xf32> to vector<1x32xf32>
      %31 = vector.shape_cast %27 : vector<1x32xf32> to vector<1x1x32xf32>
      tpu.vector_store %arg4[%c0_19, %28, %c0_20], %31 {strides = array<i32>} : memref<1x8x32xf32, #tpu.memory_space<vmem>>, vector<1x1x32xf32>,
    } else {
    }
    %c0_8 = arith.constant 0 : index
    %c0_9 = arith.constant 0 : index
    %c0_10 = arith.constant 0 : index
    %13 = vector.load %arg4[%c0_8, %c0_9, %c0_10] : memref<1x8x32xf32, #tpu.memory_space<vmem>>, vector<1x8x32xf32>
    %14 = vector.shape_cast %13 : vector<1x8x32xf32> to vector<8x32xf32>
    %cst_11 = arith.constant 0xFF800000 : f32
    %15 = vector.broadcast %cst_11 : f32 to vector<8x32xf32>
    %16 = arith.cmpf oeq, %14, %15 : vector<8x32xf32>
    %cst_12 = arith.constant 0.000000e+00 : f32
    %17 = vector.broadcast %cst_12 : f32 to vector<8x32xf32>
    %18 = arith.select %16, %17, %14 : vector<8x32xi1>, vector<8x32xf32>
    %c0_13 = arith.constant 0 : index
    %c0_14 = arith.constant 0 : index
    %c0_15 = arith.constant 0 : index
    %19 = vector.load %arg4[%c0_13, %c0_14, %c0_15] : memref<1x8x32xf32, #tpu.memory_space<vmem>>, vector<1x8x32xf32>
    %20 = vector.shape_cast %19 : vector<1x8x32xf32> to vector<8x32xf32>
    %21 = vector.shape_cast %18 : vector<8x32xf32> to vector<1x8x32xf32>
    tpu.vector_store %arg4[%c0_13, %c0_14, %c0_15], %21 {strides = array<i32>} : memref<1x8x32xf32, #tpu.memory_space<vmem>>, vector<1x8x32xf32>,
    return
  }
  func.func @transform_0(%arg0: i32, %arg1: i32, %arg2: memref<32xi32, #tpu.memory_space<smem>>) -> (i32, i32, i32) {
    %c0_i32 = arith.constant 0 : i32
    %c0_i32_0 = arith.constant 0 : i32
    return %arg0, %c0_i32, %arg1 : i32, i32, i32
  }
  func.func @transform_1(%arg0: i32, %arg1: i32, %arg2: memref<32xi32, #tpu.memory_space<smem>>) -> (i32, i32, i32) {
    %c0_i32 = arith.constant 0 : i32
    %c0_i32_0 = arith.constant 0 : i32
    return %arg0, %c0_i32, %arg1 : i32, i32, i32
  }
}

</mosaic_0001>

<llo_original>
// kernel: tpu_custom_call.1
$region0: #{tpu_custom_call.1}
  #allocation0 [shape = 'u32[]', space=smem, size = 0x4, offset = 0x4, fixed_abs, tag = 'smem constant byte address 0x4 - core index']
  #allocation1 [shape = 'u32[72,128]{1,0:T(1,128)}', space=vmem, size = 0x9000, scoped, tag = 'internal scratch']
  #allocation2 [shape = 's32[1]{0}', space=sflag, size = 0x4, scoped, tag = 'scoped memory for tpu_custom_call.1']
  #allocation3 [shape = 'u8[512]{0}', space=smem, size = 0x200, scoped, tag = 'prefetched SMEM operand 0']
  %s0 = inlined_call_operand.hbm [shape: s32[32], index: 0, kind: input, shape index: {}]
  %s1 = inlined_call_operand.hbm [shape: f32[2,16,32], index: 1, kind: input, shape index: {}]
  %s2 = inlined_call_operand.hbm [shape: f32[2,8,32], index: 2, kind: output, shape index: {}]
  %s3 = sld [smem:[#allocation0]]
  $region60: #{tpu_custom_call.1} parent=0
    _
  %s5 = ssub.s32 1, %s3
  %s6 = scalar_select 0, %s5, %s3
  %s8 = sshll.u32 %s0, 4
  %s9 = int_to_ptr.hbm [resolvable:$true] %s8
  %11 = dma.hbm_to_smem %s9, 16, [#allocation3], [#allocation2]
  %13 = dma.done [#allocation2], 16
  %14 = sfence
  $region1: #{tpu_custom_call.1} parent=0
    #allocation4 [shape = 'u8[16384]{0}', space=vmem, size = 0x4000, scoped, tag = 'input window, operand 1']
    #allocation5 [shape = 's32[2]{0}', space=sflag, size = 0x8, scoped, tag = 'scoped memory for tpu_custom_call.1']
    #allocation6 [shape = 's32[2]{0}', space=sflag, size = 0x8, scoped, tag = 'scoped memory for tpu_custom_call.1']
    #allocation7 [shape = 'u8[8192]{0}', space=vmem, size = 0x2000, scoped, tag = 'output window, operand 0']
    %15 = vsyncpa [#allocation5], 0
    %s16 = scalar_lea.sflag [#allocation5], 1
    %17 = vsyncpa %s16, 0
    %18 = vsyncpa [#allocation6], 0
    %s19 = scalar_lea.sflag [#allocation6], 1
    %20 = vsyncpa %s19, 0
    loop: start=0, step=1, limit=4
    $region2: #{tpu_custom_call.1} parent=1 // loop_pre_header
      _
    $region3: #{tpu_custom_call.1} parent=1 // loop_header
      %s22 = sphi 0, %s26
      %p23 = scmp.ge.s32.totalorder %s22, 4
      %s29 = sphi 0, %s41
      %s30 = sphi 0, %s37
      %s31 = sphi 0, %s29
      %s32 = sphi 0, %s30
      %s33 = sphi 0, %s31
      %s34 = sphi 0, %s32
      %s46 = sphi 0, %s48
      %s49 = sphi 0, %s46
      %s50 = sphi 0, %s49
      %s66 = sphi 0, %s50
      %s74 = sphi 0, %s76
      %s77 = sphi 0, %s74
      %s78 = sphi 0, %s77
      %s94 = sphi 0, %s78
    $region4: #{tpu_custom_call.1} parent=1 // loop_header_branch
      %25 = sbr.rel (%p23) target = $region8
    $region5: #{tpu_custom_call.1} parent=1 // loop_body
      %s27 = ssub.s32 %s22, 1
      %s28 = ssub.s32 %s22, 2
      %s35 = sadd.s32 1, %s30
      %p36 = scmp.ge.s32.totalorder %s35, 1
      %s37 = scalar_select %p36, 0, %s35
      %s38 = sadd.s32 1, %s29
      %s39 = scalar_select %p36, %s38, %s29
      %p40 = scmp.ge.s32.totalorder %s39, 2
      %s41 = scalar_select %p40, 0, %s39
      %s42 = ssub.s32 %s29, %s41
      %s43 = ssub.s32 %s30, %s37
      %s44 = sor.u32 %s42, %s43
      %p45 = scmp.eq.s32.totalorder %s44, 0
      %s47 = sadd.s32 %s46, 1
      %s48 = scalar_select %p45, %s46, %s47
      %p51 = pneg %p45
      %p52 = scmp.eq.s32.totalorder %s22, 1
      %p53 = por %p51, %p52
      %p54 = scmp.ne.s32.totalorder %s46, %s49
      %p55 = scmp.eq.s32.totalorder %s22, 0
      %p56 = por %p54, %p55
      %p57 = scmp.ne.s32.totalorder %s46, %s49
      %p58 = scmp.eq.s32.totalorder %s27, 1
      %p59 = por %p57, %p58
      %p60 = scmp.ne.s32.totalorder %s49, %s50
      %p61 = scmp.eq.s32.totalorder %s27, 0
      %p62 = por %p60, %p61
      %p63 = scmp.ne.s32.totalorder %s49, %s50
      %p64 = scmp.eq.s32.totalorder %s28, 1
      %p65 = por %p63, %p64
      %p67 = scmp.ne.s32.totalorder %s50, %s66
      %p68 = scmp.eq.s32.totalorder %s28, 0
      %p69 = por %p67, %p68
      %s70 = ssub.s32 %s29, %s41
      %s71 = ssub.s32 %s30, %s37
      %s72 = sor.u32 %s70, %s71
      %p73 = scmp.eq.s32.totalorder %s72, 0
      %s75 = sadd.s32 %s74, 1
      %s76 = scalar_select %p73, %s74, %s75
      %p79 = pneg %p73
      %p80 = scmp.eq.s32.totalorder %s22, 1
      %p81 = por %p79, %p80
      %p82 = scmp.ne.s32.totalorder %s74, %s77
      %p83 = scmp.eq.s32.totalorder %s22, 0
      %p84 = por %p82, %p83
      %p85 = scmp.ne.s32.totalorder %s74, %s77
      %p86 = scmp.eq.s32.totalorder %s27, 1
      %p87 = por %p85, %p86
      %p88 = scmp.ne.s32.totalorder %s77, %s78
      %p89 = scmp.eq.s32.totalorder %s27, 0
      %p90 = por %p88, %p89
      %p91 = scmp.ne.s32.totalorder %s77, %s78
      %p92 = scmp.eq.s32.totalorder %s28, 1
      %p93 = por %p91, %p92
      %p95 = scmp.ne.s32.totalorder %s78, %s94
      %p96 = scmp.eq.s32.totalorder %s28, 0
      %p97 = por %p95, %p96
      %p98 = scmp.le.s32.totalorder 1, %s22
      %p99 = scmp.lt.s32.totalorder %s22, 3
      %p100 = pnand %p98, %p99
      %p101 = pneg %p100
      // Predicated region
      $region9: #{tpu_custom_call.1} parent=5 // pred_check
        _
      $region10: #{tpu_custom_call.1} parent=5 // pred_check_branch
        %103 = sbr.rel (%p100) target = $region12
      $region11: #{tpu_custom_call.1} parent=5 // pred_region
        %s104 = ssub.s32 %s22, 1
      $region12: #{tpu_custom_call.1} parent=5 // pred_fallthru
        _
      %p105 = scmp.lt.s32.totalorder %s22, 2
      // Predicated region
      $region13: #{tpu_custom_call.1} parent=5 // pred_check
        %p106 = pneg %p105
      $region14: #{tpu_custom_call.1} parent=5 // pred_check_branch
        %108 = sbr.rel (%p106) target = $region16
      $region15: #{tpu_custom_call.1} parent=5 // pred_region
        // Predicated region
        $region17: #{tpu_custom_call.1} parent=15 // pred_check
          %p109 = pneg %p56
        $region18: #{tpu_custom_call.1} parent=15 // pred_check_branch
          %111 = sbr.rel (%p109) target = $region20
        $region19: #{tpu_custom_call.1} parent=15 // pred_region
          %s112 = sand.u32 %s46, 1
          %s113 = scalar_lea.sflag [#allocation5], %s112
          %s114 = sand.u32 %s46, 1
          %s115 = smul.addr %s114, 16
          %s116 = scalar_lea.vmem [#allocation4], %s115
          %118 = vsyncadd %s113, 0
          %s119 = smul.addr %s29, 2
          %s120 = sadd.s32 %s30, %s119
          %s121 = smul.addr %s120, 8
          %s122 = scalar_lea.hbm %s1, %s121
          %s123 = sshll.u32 %s122, 4
          %s124 = int_to_ptr.hbm [resolvable:$true] %s123
          %s125 = sshll.u32 %s116, 4
          %s126 = int_to_ptr.vmem [resolvable:$true] %s125
          %131 = dma.hbm_to_vmem [thread:$0]  %s124, 256, %s126, %s113, 128, 128, 8
        $region20: #{tpu_custom_call.1} parent=15 // pred_fallthru
          _
      $region16: #{tpu_custom_call.1} parent=5 // pred_fallthru
        _
      %p132 = scmp.le.s32.totalorder 1, %s22
      %p133 = scmp.lt.s32.totalorder %s22, 3
      %p134 = pnand %p132, %p133
      %p135 = pneg %p134
      // Predicated region
      $region21: #{tpu_custom_call.1} parent=5 // pred_check
        _
      $region22: #{tpu_custom_call.1} parent=5 // pred_check_branch
        %137 = sbr.rel (%p134) target = $region24
      $region23: #{tpu_custom_call.1} parent=5 // pred_region
        %s138 = ssub.s32 %s22, 1
        %s139 = sand.u32 %s49, 1
        %s140 = scalar_lea.sflag [#allocation5], %s139
        %s141 = sand.u32 %s49, 1
        %s142 = smul.addr %s141, 16
        %s143 = scalar_lea.vmem [#allocation4], %s142
        // Predicated region
        $region25: #{tpu_custom_call.1} parent=23 // pred_check
          %p144 = pneg %p62
        $region26: #{tpu_custom_call.1} parent=23 // pred_check_branch
          %146 = sbr.rel (%p144) target = $region28
        $region27: #{tpu_custom_call.1} parent=23 // pred_region
          %148 = dma.done %s140, 256
        $region28: #{tpu_custom_call.1} parent=23 // pred_fallthru
          _
        %s149 = sand.u32 %s49, 1
        %s150 = scalar_lea.sflag [#allocation5], %s149
        %s151 = sand.u32 %s49, 1
        %s152 = smul.addr %s151, 16
        %s153 = scalar_lea.vmem [#allocation4], %s152
        %p154 = pneg %p62
        %p155 = pneg %p59
        %p156 = pneg %p90
        %p157 = pneg %p87
        %s158 = sand.u32 %s77, 1
        %s159 = scalar_lea.sflag [#allocation6], %s158
        %s160 = sand.u32 %s77, 1
        %s161 = smul.addr %s160, 8
        %s162 = scalar_lea.vmem [#allocation7], %s161
        %s163 = smul.u32 %s31, 16
        %vm164 = vcmask 261120
        %165 = vst.msk [vmem:[%s162] sm:$0xff] %vm164, -inf
        %s166 = sld [smem:[#allocation3 + %s163]]
        loop: start=0, step=1, limit=16
        $region29: #{tpu_custom_call.1} parent=23 // loop_pre_header
          _
        $region30: #{tpu_custom_call.1} parent=23 // loop_header
          %s168 = sphi 0, %s172
          %p169 = scmp.ge.s32.totalorder %s168, 16
          %s173 = sphi %s166, %s176
          %v174 = vphi -inf, %v199
        $region31: #{tpu_custom_call.1} parent=23 // loop_header_branch
          %171 = sbr.rel (%p169) target = $region35
        $region32: #{tpu_custom_call.1} parent=23 // loop_body
          %s175 = sadd.s32 %s163, %s168
          %s176 = sld [smem:[#allocation3 + %s175]]
          %s177 = scalar_lea.vmem %s143, %s168 [#allocation4]
          %v178 = vld [vmem:[%s177] sm:$0x1]
          %p179 = scmp.ne.s32.totalorder %s176, %s173
          // Predicated region
          $region36: #{tpu_custom_call.1} parent=32 // pred_check
            %p180 = pneg %p179
          $region37: #{tpu_custom_call.1} parent=32 // pred_check_branch
            %182 = sbr.rel (%p180) target = $region39
          $region38: #{tpu_custom_call.1} parent=32 // pred_region
            %p183 = scmp.ge.s32.totalorder %s173, 0
            // Predicated region
            $region40: #{tpu_custom_call.1} parent=38 // pred_check
              %p184 = pneg %p183
            $region41: #{tpu_custom_call.1} parent=38 // pred_check_branch
              %186 = sbr.rel (%p184) target = $region43
            $region42: #{tpu_custom_call.1} parent=38 // pred_region
              %p187 = scmp.gt.s32.totalorder %s173, 0
              %s188 = scalar_select %p187, %s173, 0
              %p189 = scmp.lt.s32.totalorder %s188, 7
              %s190 = scalar_select %p189, %s188, 7
              %s191 = scalar_lea.vmem %s162, %s190 [#allocation7]
              %v192 = vld [vmem:[%s191] sm:$0x1]
              %v193 = vmax.f32 %v192, %v174
              %vm194 = vcmask 253952
              %195 = vst.msk [vmem:[%s191] sm:$0x1] %vm194, %v193
            $region43: #{tpu_custom_call.1} parent=38 // pred_fallthru
              _
          $region39: #{tpu_custom_call.1} parent=32 // pred_fallthru
            _
          %s196 = scalar_select %p179, -inf, 0.0
          %v197 = vstv %s196
          %v198 = vadd.f32 %v174, %v197
          %v199 = vmax.f32 %v178, %v198
        $region33: #{tpu_custom_call.1} parent=23 // loop_footer
          %s172 = sadd.s32 1, %s168
        $region34: #{tpu_custom_call.1} parent=23 // loop_footer_branch
          %167 = sbr.rel target = $region30
        $region35: #{tpu_custom_call.1} parent=23 // loop_exit
          _
        %p200 = scmp.ge.s32.totalorder %s173, 0
        // Predicated region
        $region44: #{tpu_custom_call.1} parent=23 // pred_check
          %p201 = pneg %p200
        $region45: #{tpu_custom_call.1} parent=23 // pred_check_branch
          %203 = sbr.rel (%p201) target = $region47
        $region46: #{tpu_custom_call.1} parent=23 // pred_region
          %p204 = scmp.gt.s32.totalorder %s173, 0
          %s205 = scalar_select %p204, %s173, 0
          %p206 = scmp.lt.s32.totalorder %s205, 7
          %s207 = scalar_select %p206, %s205, 7
          %s208 = scalar_lea.vmem %s162, %s207 [#allocation7]
          %v209 = vld [vmem:[%s208] sm:$0x1]
          %v210 = vmax.f32 %v209, %v174
          %vm211 = vcmask 253952
          %212 = vst.msk [vmem:[%s208] sm:$0x1] %vm211, %v210
        $region47: #{tpu_custom_call.1} parent=23 // pred_fallthru
          _
        %v213 = vld [vmem:[%s162] sm:$0xff]
        %vm214 = vcmp.eq.f32.partialorder %v213, -inf
        %v215 = vsel %vm214, 0.0, %v213
        %216 = vst.msk [vmem:[%s162] sm:$0xff] %vm164, %v215
        %s217 = sand.u32 %s77, 1
        %s218 = scalar_lea.sflag [#allocation6], %s217
        %s219 = sand.u32 %s77, 1
        %s220 = smul.addr %s219, 8
        %s221 = scalar_lea.vmem [#allocation7], %s220
        // Predicated region
        $region48: #{tpu_custom_call.1} parent=23 // pred_check
          %p222 = pneg %p87
        $region49: #{tpu_custom_call.1} parent=23 // pred_check_branch
          %224 = sbr.rel (%p222) target = $region51
        $region50: #{tpu_custom_call.1} parent=23 // pred_region
          %226 = vsyncadd %s218, 0
          %s227 = sadd.s32 %s32, %s31
          %s228 = smul.addr %s227, 8
          %s229 = scalar_lea.hbm %s2, %s228
          %s231 = sshll.u32 %s221, 4
          %s232 = int_to_ptr.vmem [resolvable:$true] %s231
          %s233 = sshll.u32 %s229, 4
          %s234 = int_to_ptr.hbm [resolvable:$true] %s233
          %236 = dma.vmem_to_hbm [thread:$0]  %s232, 128, %s234, %s218
        $region51: #{tpu_custom_call.1} parent=23 // pred_fallthru
          _
      $region24: #{tpu_custom_call.1} parent=5 // pred_fallthru
        _
      %p237 = scmp.le.s32.totalorder 2, %s22
      // Predicated region
      $region52: #{tpu_custom_call.1} parent=5 // pred_check
        %p238 = pneg %p237
      $region53: #{tpu_custom_call.1} parent=5 // pred_check_branch
        %240 = sbr.rel (%p238) target = $region55
      $region54: #{tpu_custom_call.1} parent=5 // pred_region
        %s241 = ssub.s32 %s22, 2
        // Predicated region
        $region56: #{tpu_custom_call.1} parent=54 // pred_check
          %p242 = pneg %p93
        $region57: #{tpu_custom_call.1} parent=54 // pred_check_branch
          %244 = sbr.rel (%p242) target = $region59
        $region58: #{tpu_custom_call.1} parent=54 // pred_region
          %s245 = sand.u32 %s78, 1
          %s246 = scalar_lea.sflag [#allocation6], %s245
          %s247 = sand.u32 %s78, 1
          %s248 = smul.addr %s247, 8
          %s249 = scalar_lea.vmem [#allocation7], %s248
          %251 = dma.done %s246, 128
        $region59: #{tpu_custom_call.1} parent=54 // pred_fallthru
          _
      $region55: #{tpu_custom_call.1} parent=5 // pred_fallthru
        _
    $region6: #{tpu_custom_call.1} parent=1 // loop_footer
      %s26 = sadd.s32 1, %s22
    $region7: #{tpu_custom_call.1} parent=1 // loop_footer_branch
      %21 = sbr.rel target = $region3
    $region8: #{tpu_custom_call.1} parent=1 // loop_exit
      _
    %252 = vsyncpa [#allocation5], 1
    %s253 = scalar_lea.sflag [#allocation5], 1
    %254 = vsyncpa %s253, 1
    %255 = vsyncpa [#allocation6], 1
    %s256 = scalar_lea.sflag [#allocation6], 1
    %257 = vsyncpa %s256, 1

</llo_original>
